<compile_context>
chip_gen: v5e
topology: v5e:2x2
jax: 0.10.0
libtpu: 0.0.40
codegen_flags: <defaults>
</compile_context>

<pallas_src>
import functools

import jax
import jax.numpy as jnp
from jax.experimental import pallas as pl
from jax.experimental.pallas import tpu as pltpu

LN_EPS = 1e-5  # torch.nn.LayerNorm default


# --------------------------------------------------------------------------
# Helpers: per-generation VMEM budget and tile selection
# --------------------------------------------------------------------------
def _vmem_limit_bytes():
    cap = None
    try:
        info = pltpu.get_tpu_info()
        cap = getattr(info, "vmem_capacity_bytes", None)
    except Exception:
        cap = None
    if cap is None:
        cap = 64 * 1024 * 1024
    if cap <= 64 * 1024 * 1024:          # v7x: 64 MiB physical -> leave headroom
        return 40 * 1024 * 1024
    return 96 * 1024 * 1024              # v5e / v6e: 128 MiB physical


def _choose_tile(n, target):
    """Largest tile <= target that divides n and satisfies the (8,128) sublane rule."""
    t = min(n, target)
    if n % t == 0 and (t == n or t % 8 == 0):
        return t
    for cand in range(min(n, target), 7, -1):
        if n % cand == 0 and cand % 8 == 0:
            return cand
    return n


# --------------------------------------------------------------------------
# Kernel 1: fused QKV projection, lane-dense (B, L, 3C) bf16 output
# --------------------------------------------------------------------------
def _qkv_kernel(x_ref, w_ref, b_ref, qkv_ref):
    # x_ref: (1, TL, C); w_ref: (C, 3C) bf16 (q columns pre-scaled by hd^-0.5)
    # b_ref: (1, 3C) f32 (k bias slot is zero); qkv_ref: (1, TL, 3C) bf16
    x = x_ref[0].astype(jnp.bfloat16)
    y = jnp.dot(x, w_ref[...], preferred_element_type=jnp.float32) + b_ref[...]
    qkv_ref[0] = y.astype(jnp.bfloat16)


# --------------------------------------------------------------------------
# Kernel 2: key-tiled online-softmax attention + LayerNorm + out_proj
#   grid = (B, L/TQ, L/TK), last axis "arbitrary" (reduction over key tiles)
# --------------------------------------------------------------------------
def _attn_kernel(*refs, num_heads, head_dim, has_bias):
    if has_bias:
        (q_ref, k_ref, v_ref, bias_ref, lnw_ref, lnb_ref, ow_ref, ob_ref,
         out_ref, m_ref, l_ref, acc_ref) = refs
    else:
        (q_ref, k_ref, v_ref, lnw_ref, lnb_ref, ow_ref, ob_ref,
         out_ref, m_ref, l_ref, acc_ref) = refs
        bias_ref = None

    H, hd = num_heads, head_dim
    kt = pl.program_id(2)
    n_kt = pl.num_programs(2)

    @pl.when(kt == 0)
    def _init():
        m_ref[...] = jnp.full(m_ref.shape, -jnp.inf, m_ref.dtype)
        l_ref[...] = jnp.zeros(l_ref.shape, l_ref.dtype)
        acc_ref[...] = jnp.zeros(acc_ref.shape, acc_ref.dtype)

    q2 = q_ref[0]    # (TQ, C) bf16, q already scaled by hd^-0.5
    k2 = k_ref[0]    # (TK, C) bf16
    v2 = v_ref[0]    # (TK, C) bf16

    # Per-head QK^T (contraction over hd channels, static lane slices of the
    # dense C-wide slabs). Stacking along a new leading axis is layout-free,
    # so the online-softmax update below is vectorized over heads.
    s_list = []
    for h in range(H):
        sl = slice(h * hd, (h + 1) * hd)
        s_list.append(jax.lax.dot_general(
            q2[:, sl], k2[:, sl], (((1,), (1,)), ((), ())),
            preferred_element_type=jnp.float32))          # (TQ, TK) f32
    s = jnp.stack(s_list, axis=0)                         # (H, TQ, TK) f32
    if bias_ref is not None:
        s = s + bias_ref[0].astype(jnp.float32)           # (1|H, TQ, TK) bf16 bias

    m_prev = m_ref[...]                                   # (H, TQ, 1)
    m_new = jnp.maximum(m_prev, jnp.max(s, axis=-1, keepdims=True))
    alpha = jnp.exp(m_prev - m_new)                       # (H, TQ, 1)
    p = jnp.exp(s - m_new)                                # (H, TQ, TK)
    l_ref[...] = alpha * l_ref[...] + jnp.sum(p, axis=-1, keepdims=True)
    m_ref[...] = m_new
    p_bf = p.astype(jnp.bfloat16)
    # TODO(synk): dropout on attention probabilities is a train-time RNG op -> identity (eval).

    # Per-head PV, accumulated into the head's lane slice of the (TQ, C) scratch.
    for h in range(H):
        sl = slice(h * hd, (h + 1) * hd)
        pv = jnp.dot(p_bf[h], v2[:, sl], preferred_element_type=jnp.float32)
        acc_ref[:, sl] = alpha[h] * acc_ref[:, sl] + pv

    @pl.when(kt == n_kt - 1)
    def _finalize():
        inv_l = pl.reciprocal(l_ref[...], approx=True)    # (H, TQ, 1), EUP slot
        for h in range(H):
            sl = slice(h * hd, (h + 1) * hd)
            acc_ref[:, sl] = acc_ref[:, sl] * inv_l[h]
        ctx = acc_ref[...]                                # (TQ, C) f32
        # LayerNorm over the full channel dim (heads already lane-packed).
        mu = jnp.mean(ctx, axis=-1, keepdims=True)
        d = ctx - mu
        var = jnp.mean(d * d, axis=-1, keepdims=True)
        normed = d * jax.lax.rsqrt(var + LN_EPS) * lnw_ref[...] + lnb_ref[...]
        # out_proj: one full-depth (K = C) MXU contraction.
        y = jnp.dot(normed.astype(jnp.bfloat16), ow_ref[...],
                    preferred_element_type=jnp.float32) + ob_ref[...]
        out_ref[0] = y.astype(out_ref.dtype)


# --------------------------------------------------------------------------
# Parameter prep: fold q scaling, fuse QKV weights, cast matmul weights bf16
# (weights are stored (in, out); k_proj has no bias, as in the module)
# --------------------------------------------------------------------------
def _prepare_params(params, num_heads, C):
    hd = C // num_heads
    scale = float(hd) ** -0.5
    f32, bf16 = jnp.float32, jnp.bfloat16
    w_qkv = jnp.concatenate(
        [params["qw"].astype(f32) * scale,
         params["kw"].astype(f32),
         params["vw"].astype(f32)], axis=1).astype(bf16)                 # (C, 3C)
    b_qkv = jnp.concatenate(
        [params["qb"].astype(f32) * scale,
         jnp.zeros((C,), f32),                                           # k: no bias
         params["vb"].astype(f32)]).reshape(1, 3 * C)
    lnw = params["ln_w"].astype(f32).reshape(1, C)
    lnb = params["ln_b"].astype(f32).reshape(1, C)
    ow = params["ow"].astype(bf16)                                       # (C, C)
    ob = params["ob"].astype(f32).reshape(1, C)
    return w_qkv, b_qkv, lnw, lnb, ow, ob


def _normalize_bias(attn_bias, B, H, L):
    """Return bias as (1|B, 1|H, L, L) bf16, or None. No broadcast materialization."""
    if attn_bias is None:
        return None
    ab = jnp.asarray(attn_bias)
    if ab.ndim == 2:                         # (L, L) shared
        ab = ab.reshape(1, 1, L, L)
    elif ab.ndim == 3:
        if ab.shape[0] == B * H:             # (B*H, L, L): usual torch layout
            ab = ab.reshape(B, H, L, L)
        elif ab.shape[0] == H:               # (H, L, L) shared across batch
            ab = ab.reshape(1, H, L, L)
        elif ab.shape[0] == 1:
            ab = ab.reshape(1, 1, L, L)
        else:
            raise ValueError(f"unsupported attn_bias shape {ab.shape}")
    elif ab.ndim != 4:
        raise ValueError(f"unsupported attn_bias shape {ab.shape}")
    assert ab.shape[2:] == (L, L) and ab.shape[0] in (1, B) and ab.shape[1] in (1, H)
    return ab.astype(jnp.bfloat16)


# --------------------------------------------------------------------------
# Wrapper: mirrors MultiheadAttention.forward.
#   x: (B, L, C) batch-first; returns (B, L, C). (The torch module uses
#   seq-first (L, B, C); the layout permutation is left to the consumer so
#   no standalone transpose pass is paid here.)
# --------------------------------------------------------------------------
def multihead_attention(x, attn_bias, params, num_heads, *,
                        tile_l=None, tile_q=None, tile_k=None):
    B, L, C = x.shape
    H = num_heads
    hd = C // H
    assert hd * H == C, "embed_dim must be divisible by num_heads"
    assert C % 128 == 0, "embed_dim must be a multiple of 128 (lane-dense tiling)"

    tile_l = tile_l or _choose_tile(L, 512)
    tile_q = tile_q or _choose_tile(L, 256)
    tile_k = tile_k or _choose_tile(L, 256)
    assert L % tile_l == 0 and L % tile_q == 0 and L % tile_k == 0

    w_qkv, b_qkv, lnw, lnb, ow, ob = _prepare_params(params, H, C)
    bias4 = _normalize_bias(attn_bias, B, H, L)
    has_bias = bias4 is not None

    vmem_limit = _vmem_limit_bytes()

    # ---- kernel 1: fused QKV projection -> lane-dense (B, L, 3C) bf16 ----
    qkv = pl.pallas_call(
        _qkv_kernel,
        out_shape=jax.ShapeDtypeStruct((B, L, 3 * C), jnp.bfloat16),
        grid=(B, L // tile_l),
        in_specs=[
            pl.BlockSpec((1, tile_l, C), lambda b, lt: (b, lt, 0)),      # x
            pl.BlockSpec((C, 3 * C), lambda b, lt: (0, 0)),              # fused W
            pl.BlockSpec((1, 3 * C), lambda b, lt: (0, 0)),              # fused bias
        ],
        out_specs=pl.BlockSpec((1, tile_l, 3 * C), lambda b, lt: (b, lt, 0)),
        compiler_params=pltpu.CompilerParams(
            dimension_semantics=("parallel", "parallel"),
            vmem_limit_bytes=vmem_limit),
    )(x, w_qkv, b_qkv)

    # ---- kernel 2: key-tiled online-softmax attention + LN + out_proj ----
    kernel2 = functools.partial(_attn_kernel, num_heads=H, head_dim=hd,
                                has_bias=has_bias)

    in_specs = [
        pl.BlockSpec((1, tile_q, C), lambda b, qt, kt: (b, qt, 0)),      # Q slab
        pl.BlockSpec((1, tile_k, C), lambda b, qt, kt: (b, kt, 1)),      # K slab
        pl.BlockSpec((1, tile_k, C), lambda b, qt, kt: (b, kt, 2)),      # V slab
    ]
    operands = [qkv, qkv, qkv]
    if has_bias:
        Bb, Hb = bias4.shape[0], bias4.shape[1]
        if Bb == B:
            bias_map = lambda b, qt, kt: (b, 0, qt, kt)
        else:
            bias_map = lambda b, qt, kt: (0, 0, qt, kt)
        in_specs.append(pl.BlockSpec((1, Hb, tile_q, tile_k), bias_map))
        operands.append(bias4)
    in_specs += [
        pl.BlockSpec((1, C), lambda b, qt, kt: (0, 0)),                  # LN weight
        pl.BlockSpec((1, C), lambda b, qt, kt: (0, 0)),                  # LN bias
        pl.BlockSpec((C, C), lambda b, qt, kt: (0, 0)),                  # out_proj W
        pl.BlockSpec((1, C), lambda b, qt, kt: (0, 0)),                  # out_proj b
    ]
    operands += [lnw, lnb, ow, ob]
    # TODO(synk): on v7x, pipeline_mode=pl.Buffered(1) on the constant-weight
    # BlockSpecs would reclaim their double buffers for larger tiles.

    out = pl.pallas_call(
        kernel2,
        out_shape=jax.ShapeDtypeStruct((B, L, C), x.dtype),
        grid=(B, L // tile_q, L // tile_k),
        in_specs=in_specs,
        out_specs=pl.BlockSpec((1, tile_q, C), lambda b, qt, kt: (b, qt, 0)),
        scratch_shapes=[
            pltpu.VMEM((H, tile_q, 1), jnp.float32),   # running max  m
            pltpu.VMEM((H, tile_q, 1), jnp.float32),   # running sum  l
            pltpu.VMEM((tile_q, C), jnp.float32),      # context accumulator
        ],
        compiler_params=pltpu.CompilerParams(
            dimension_semantics=("parallel", "parallel", "arbitrary"),
            vmem_limit_bytes=vmem_limit),
    )(*operands)
    return out


# --------------------------------------------------------------------------
# Parameter init (weights stored as (in, out); k_proj has no bias)
# --------------------------------------------------------------------------
def init_params(key, C):
    ks = jax.random.split(key, 4)
    std = 0.02
    f32 = jnp.float32
    return {
        "qw": jax.random.normal(ks[0], (C, C), f32) * std,
        "qb": jnp.zeros((C,), f32),
        "kw": jax.random.normal(ks[1], (C, C), f32) * std,   # no bias
        "vw": jax.random.normal(ks[2], (C, C), f32) * std,
        "vb": jnp.zeros((C,), f32),
        "ln_w": jnp.ones((C,), f32),
        "ln_b": jnp.zeros((C,), f32),
        "ow": jax.random.normal(ks[3], (C, C), f32) * std,
        "ob": jnp.zeros((C,), f32),
    }


# --------------------------------------------------------------------------
# Pure-JAX f32 reference (batch-first), matching the torch forward semantics
# --------------------------------------------------------------------------
def _reference(x, attn_bias, params, H):
    B, L, C = x.shape
    hd = C // H
    q = (x @ params["qw"] + params["qb"]) * (hd ** -0.5)
    k = x @ params["kw"]
    v = x @ params["vw"] + params["vb"]
    split = lambda t: t.reshape(B, L, H, hd).transpose(0, 2, 1, 3)
    s = jnp.einsum("bhqd,bhkd->bhqk", split(q), split(k))
    if attn_bias is not None:
        s = s + jnp.asarray(attn_bias, jnp.float32).reshape(B, H, L, L)
    p = jax.nn.softmax(s, axis=-1)
    ctx = jnp.einsum("bhqk,bhkd->bhqd", p, split(v)).transpose(0, 2, 1, 3).reshape(B, L, C)
    mu = ctx.mean(-1, keepdims=True)
    var = ((ctx - mu) ** 2).mean(-1, keepdims=True)
    nrm = (ctx - mu) / jnp.sqrt(var + LN_EPS) * params["ln_w"] + params["ln_b"]
    return nrm @ params["ow"] + params["ob"]


if __name__ == "__main__":
    # Small shapes consistent with the module (C multiple of 128, divisible by heads).
    B, L, C, H = 2, 32, 128, 4

    key = jax.random.PRNGKey(0)
    kx, kb, kp = jax.random.split(key, 3)
    x = jax.random.normal(kx, (B, L, C), jnp.float32)               # query, batch-first
    attn_bias = jax.random.normal(kb, (B * H, L, L), jnp.float32) * 0.1
    params = init_params(kp, C)

    out = multihead_attention(x, attn_bias, params, H)              # default tiles
    out = jax.block_until_ready(out)

    assert out.shape == (B, L, C), out.shape
    assert bool(jnp.all(jnp.isfinite(out)))

    ref = _reference(x, attn_bias, params, H)
    err = float(jnp.max(jnp.abs(out.astype(jnp.float32) - ref)))
    assert err < 2e-1, f"max abs error vs reference: {err}"          # bf16 inference tolerance

    print("KERNEL_OK")
</pallas_src>

<mosaic_0001>
module attributes {stable_mosaic.version = 11 : i64} {
  func.func @_qkv_kernel(%arg0: i32, %arg1: i32, %arg2: memref<1x32x128xf32, #tpu.memory_space<vmem>>, %arg3: memref<128x384xbf16, #tpu.memory_space<vmem>>, %arg4: memref<1x384xf32, #tpu.memory_space<vmem>>, %arg5: memref<1x32x384xbf16, #tpu.memory_space<vmem>>) attributes {dimension_semantics = [#tpu.dimension_semantics<parallel>, #tpu.dimension_semantics<parallel>], iteration_bounds = array<i64: 2, 1>, scalar_prefetch = 0 : i64, scratch_operands = 0 : i64, tpu.core_type = #tpu.core_type<tc>, window_params = [{transform_indices = @transform_0, window_bounds = array<i64: 1, 32, 128>}, {pipeline_mode = #tpu.pipeline_mode<synchronous>, transform_indices = @transform_1, window_bounds = array<i64: 128, 384>}, {pipeline_mode = #tpu.pipeline_mode<synchronous>, transform_indices = @transform_2, window_bounds = array<i64: 1, 384>}, {transform_indices = @transform_3, window_bounds = array<i64: 1, 32, 384>}]} {
    %c0 = arith.constant 0 : index
    %c0_0 = arith.constant 0 : index
    %c0_1 = arith.constant 0 : index
    %0 = vector.load %arg2[%c0, %c0_0, %c0_1] : memref<1x32x128xf32, #tpu.memory_space<vmem>>, vector<1x32x128xf32>
    %1 = vector.shape_cast %0 : vector<1x32x128xf32> to vector<32x128xf32>
    %2 = arith.truncf %1 : vector<32x128xf32> to vector<32x128xbf16>
    %c0_2 = arith.constant 0 : index
    %c0_3 = arith.constant 0 : index
    %3 = vector.load %arg3[%c0_2, %c0_3] : memref<128x384xbf16, #tpu.memory_space<vmem>>, vector<128x384xbf16>
    %cst = arith.constant dense<0.000000e+00> : vector<32x384xf32>
    %4 = tpu.matmul %2, %3, %cst {dimension_numbers = #tpu.dot_dimension_numbers<[1], [0], [0], [1], [0, 0, 1, 1], [], []>} : vector<32x128xbf16>, vector<128x384xbf16>, vector<32x384xf32> -> vector<32x384xf32>
    %c0_4 = arith.constant 0 : index
    %c0_5 = arith.constant 0 : index
    %5 = vector.load %arg4[%c0_4, %c0_5] : memref<1x384xf32, #tpu.memory_space<vmem>>, vector<1x384xf32>
    %6 = vector.broadcast %5 : vector<1x384xf32> to vector<32x384xf32>
    %7 = arith.addf %4, %6 : vector<32x384xf32>
    %8 = arith.truncf %7 : vector<32x384xf32> to vector<32x384xbf16>
    %c0_6 = arith.constant 0 : index
    %c0_7 = arith.constant 0 : index
    %c0_8 = arith.constant 0 : index
    %9 = vector.load %arg5[%c0_6, %c0_7, %c0_8] : memref<1x32x384xbf16, #tpu.memory_space<vmem>>, vector<1x32x384xbf16>
    %10 = vector.shape_cast %9 : vector<1x32x384xbf16> to vector<32x384xbf16>
    %11 = vector.shape_cast %8 : vector<32x384xbf16> to vector<1x32x384xbf16>
    tpu.vector_store %arg5[%c0_6, %c0_7, %c0_8], %11 {strides = array<i32>} : memref<1x32x384xbf16, #tpu.memory_space<vmem>>, vector<1x32x384xbf16>,
    return
  }
  func.func @transform_0(%arg0: i32, %arg1: i32) -> (i32, i32, i32) {
    %c0_i32 = arith.constant 0 : i32
    %c0_i32_0 = arith.constant 0 : i32
    return %arg0, %arg1, %c0_i32 : i32, i32, i32
  }
  func.func @transform_1(%arg0: i32, %arg1: i32) -> (i32, i32) {
    %c0_i32 = arith.constant 0 : i32
    %c0_i32_0 = arith.constant 0 : i32
    %c0_i32_1 = arith.constant 0 : i32
    return %c0_i32, %c0_i32_0 : i32, i32
  }
  func.func @transform_2(%arg0: i32, %arg1: i32) -> (i32, i32) {
    %c0_i32 = arith.constant 0 : i32
    %c0_i32_0 = arith.constant 0 : i32
    %c0_i32_1 = arith.constant 0 : i32
    return %c0_i32, %c0_i32_0 : i32, i32
  }
  func.func @transform_3(%arg0: i32, %arg1: i32) -> (i32, i32, i32) {
    %c0_i32 = arith.constant 0 : i32
    %c0_i32_0 = arith.constant 0 : i32
    return %arg0, %arg1, %c0_i32 : i32, i32, i32
  }
}

</mosaic_0001>

<llo_original>
// kernel: tpu_custom_call.1
$region0: #{tpu_custom_call.1}
  #allocation0 [shape = 'u32[]', space=smem, size = 0x4, offset = 0x4, fixed_abs, tag = 'smem constant byte address 0x4 - core index']
  #allocation1 [shape = 'u32[72,128]{1,0:T(1,128)}', space=vmem, size = 0x9000, scoped, tag = 'internal scratch']
  %s0 = inlined_call_operand.hbm [shape: f32[2,32,128], index: 0, kind: input, shape index: {}]
  %s1 = inlined_call_operand.hbm [shape: bf16[128,384], index: 1, kind: input, shape index: {}]
  %s2 = inlined_call_operand.hbm [shape: f32[1,384], index: 2, kind: input, shape index: {}]
  %s3 = inlined_call_operand.hbm [shape: bf16[2,32,384], index: 3, kind: output, shape index: {}]
  %s4 = sld [smem:[#allocation0]]
  $region57: #{tpu_custom_call.1} parent=0
    _
  %s6 = ssub.s32 1, %s4
  %s7 = scalar_select 0, %s6, %s4
  $region1: #{tpu_custom_call.1} parent=0
    #allocation2 [shape = 'u8[32768]{0}', space=vmem, size = 0x8000, scoped, tag = 'input window, operand 0']
    #allocation3 [shape = 's32[2]{0}', space=sflag, size = 0x8, scoped, tag = 'scoped memory for tpu_custom_call.1']
    #allocation4 [shape = 's32[2]{0}', space=sflag, size = 0x8, scoped, tag = 'scoped memory for tpu_custom_call.1']
    #allocation5 [shape = 'u8[98304]{0}', space=vmem, size = 0x18000, scoped, tag = 'input window, operand 1, single buffered']
    #allocation6 [shape = 's32[1]{0}', space=sflag, size = 0x4, scoped, tag = 'scoped memory for tpu_custom_call.1']
    #allocation7 [shape = 'u8[1536]{0}', space=vmem, size = 0x800, scoped, tag = 'input window, operand 2, single buffered']
    #allocation8 [shape = 'u8[49152]{0}', space=vmem, size = 0xc000, scoped, tag = 'output window, operand 0']
    %8 = vsyncpa [#allocation3], 0
    %s9 = scalar_lea.sflag [#allocation3], 1
    %10 = vsyncpa %s9, 0
    %11 = vsyncpa [#allocation6], 0
    %12 = vsyncpa [#allocation4], 0
    %s13 = scalar_lea.sflag [#allocation4], 1
    %14 = vsyncpa %s13, 0
    loop: start=0, step=1, limit=4
    $region2: #{tpu_custom_call.1} parent=1 // loop_pre_header
      _
    $region3: #{tpu_custom_call.1} parent=1 // loop_header
      %s16 = sphi 0, %s20
      %p17 = scmp.ge.s32.totalorder %s16, 4
      %s23 = sphi 0, %s35
      %s24 = sphi 0, %s31
      %s25 = sphi 0, %s23
      %s26 = sphi 0, %s24
      %s27 = sphi 0, %s25
      %s28 = sphi 0, %s26
      %s40 = sphi 0, %s42
      %s43 = sphi 0, %s40
      %s44 = sphi 0, %s43
      %s60 = sphi 0, %s44
      %s64 = sphi 0, %s64
      %s66 = sphi 0, %s64
      %s67 = sphi 0, %s66
      %s81 = sphi 0, %s67
      %s85 = sphi 0, %s85
      %s87 = sphi 0, %s85
      %s88 = sphi 0, %s87
      %s102 = sphi 0, %s88
      %s110 = sphi 0, %s112
      %s113 = sphi 0, %s110
      %s114 = sphi 0, %s113
      %s130 = sphi 0, %s114
    $region4: #{tpu_custom_call.1} parent=1 // loop_header_branch
      %19 = sbr.rel (%p17) target = $region8
    $region5: #{tpu_custom_call.1} parent=1 // loop_body
      %s21 = ssub.s32 %s16, 1
      %s22 = ssub.s32 %s16, 2
      %s29 = sadd.s32 1, %s24
      %p30 = scmp.ge.s32.totalorder %s29, 1
      %s31 = scalar_select %p30, 0, %s29
      %s32 = sadd.s32 1, %s23
      %s33 = scalar_select %p30, %s32, %s23
      %p34 = scmp.ge.s32.totalorder %s33, 2
      %s35 = scalar_select %p34, 0, %s33
      %s36 = ssub.s32 %s23, %s35
      %s37 = ssub.s32 %s24, %s31
      %s38 = sor.u32 %s36, %s37
      %p39 = scmp.eq.s32.totalorder %s38, 0
      %s41 = sadd.s32 %s40, 1
      %s42 = scalar_select %p39, %s40, %s41
      %p45 = pneg %p39
      %p46 = scmp.eq.s32.totalorder %s16, 1
      %p47 = por %p45, %p46
      %p48 = scmp.ne.s32.totalorder %s40, %s43
      %p49 = scmp.eq.s32.totalorder %s16, 0
      %p50 = por %p48, %p49
      %p51 = scmp.ne.s32.totalorder %s40, %s43
      %p52 = scmp.eq.s32.totalorder %s21, 1
      %p53 = por %p51, %p52
      %p54 = scmp.ne.s32.totalorder %s43, %s44
      %p55 = scmp.eq.s32.totalorder %s21, 0
      %p56 = por %p54, %p55
      %p57 = scmp.ne.s32.totalorder %s43, %s44
      %p58 = scmp.eq.s32.totalorder %s22, 1
      %p59 = por %p57, %p58
      %p61 = scmp.ne.s32.totalorder %s44, %s60
      %p62 = scmp.eq.s32.totalorder %s22, 0
      %p63 = por %p61, %p62
      %s65 = sadd.s32 %s64, 1
      %p68 = scmp.eq.s32.totalorder %s16, 1
      %p69 = scmp.ne.s32.totalorder %s64, %s66
      %p70 = scmp.eq.s32.totalorder %s16, 0
      %p71 = por %p69, %p70
      %p72 = scmp.ne.s32.totalorder %s64, %s66
      %p73 = scmp.eq.s32.totalorder %s21, 1
      %p74 = por %p72, %p73
      %p75 = scmp.ne.s32.totalorder %s66, %s67
      %p76 = scmp.eq.s32.totalorder %s21, 0
      %p77 = por %p75, %p76
      %p78 = scmp.ne.s32.totalorder %s66, %s67
      %p79 = scmp.eq.s32.totalorder %s22, 1
      %p80 = por %p78, %p79
      %p82 = scmp.ne.s32.totalorder %s67, %s81
      %p83 = scmp.eq.s32.totalorder %s22, 0
      %p84 = por %p82, %p83
      %s86 = sadd.s32 %s85, 1
      %p89 = scmp.eq.s32.totalorder %s16, 1
      %p90 = scmp.ne.s32.totalorder %s85, %s87
      %p91 = scmp.eq.s32.totalorder %s16, 0
      %p92 = por %p90, %p91
      %p93 = scmp.ne.s32.totalorder %s85, %s87
      %p94 = scmp.eq.s32.totalorder %s21, 1
      %p95 = por %p93, %p94
      %p96 = scmp.ne.s32.totalorder %s87, %s88
      %p97 = scmp.eq.s32.totalorder %s21, 0
      %p98 = por %p96, %p97
      %p99 = scmp.ne.s32.totalorder %s87, %s88
      %p100 = scmp.eq.s32.totalorder %s22, 1
      %p101 = por %p99, %p100
      %p103 = scmp.ne.s32.totalorder %s88, %s102
      %p104 = scmp.eq.s32.totalorder %s22, 0
      %p105 = por %p103, %p104
      %s106 = ssub.s32 %s23, %s35
      %s107 = ssub.s32 %s24, %s31
      %s108 = sor.u32 %s106, %s107
      %p109 = scmp.eq.s32.totalorder %s108, 0
      %s111 = sadd.s32 %s110, 1
      %s112 = scalar_select %p109, %s110, %s111
      %p115 = pneg %p109
      %p116 = scmp.eq.s32.totalorder %s16, 1
      %p117 = por %p115, %p116
      %p118 = scmp.ne.s32.totalorder %s110, %s113
      %p119 = scmp.eq.s32.totalorder %s16, 0
      %p120 = por %p118, %p119
      %p121 = scmp.ne.s32.totalorder %s110, %s113
      %p122 = scmp.eq.s32.totalorder %s21, 1
      %p123 = por %p121, %p122
      %p124 = scmp.ne.s32.totalorder %s113, %s114
      %p125 = scmp.eq.s32.totalorder %s21, 0
      %p126 = por %p124, %p125
      %p127 = scmp.ne.s32.totalorder %s113, %s114
      %p128 = scmp.eq.s32.totalorder %s22, 1
      %p129 = por %p127, %p128
      %p131 = scmp.ne.s32.totalorder %s114, %s130
      %p132 = scmp.eq.s32.totalorder %s22, 0
      %p133 = por %p131, %p132
      %p134 = scmp.le.s32.totalorder 1, %s16
      %p135 = scmp.lt.s32.totalorder %s16, 3
      %p136 = pnand %p134, %p135
      %p137 = pneg %p136
      // Predicated region
      $region9: #{tpu_custom_call.1} parent=5 // pred_check
        _
      $region10: #{tpu_custom_call.1} parent=5 // pred_check_branch
        %139 = sbr.rel (%p136) target = $region12
      $region11: #{tpu_custom_call.1} parent=5 // pred_region
        %s140 = ssub.s32 %s16, 1
        // Predicated region
        $region13: #{tpu_custom_call.1} parent=11 // pred_check
          %p141 = pneg %p77
        $region14: #{tpu_custom_call.1} parent=11 // pred_check_branch
          %143 = sbr.rel (%p141) target = $region16
        $region15: #{tpu_custom_call.1} parent=11 // pred_region
          %145 = vsyncadd [#allocation6], 0
          %s146 = sshll.u32 %s1, 4
          %s147 = int_to_ptr.hbm [resolvable:$true] %s146
          %s148 = sshll.u32 [#allocation5], 4
          %s149 = int_to_ptr.vmem [resolvable:$true] %s148
          %154 = dma.hbm_to_vmem [thread:$0]  %s147, 3072, %s149, [#allocation6], 192, 192, 12
        $region16: #{tpu_custom_call.1} parent=11 // pred_fallthru
          _
        // Predicated region
        $region17: #{tpu_custom_call.1} parent=11 // pred_check
          %p155 = pneg %p98
        $region18: #{tpu_custom_call.1} parent=11 // pred_check_branch
          %157 = sbr.rel (%p155) target = $region20
        $region19: #{tpu_custom_call.1} parent=11 // pred_region
          %159 = vsyncadd [#allocation6], 0
          %s161 = sshll.u32 %s2, 4
          %s162 = int_to_ptr.hbm [resolvable:$true] %s161
          %s163 = sshll.u32 [#allocation7], 4
          %s164 = int_to_ptr.vmem [resolvable:$true] %s163
          %166 = dma.hbm_to_vmem [thread:$0]  %s162, 48, %s164, [#allocation6]
        $region20: #{tpu_custom_call.1} parent=11 // pred_fallthru
          _
      $region12: #{tpu_custom_call.1} parent=5 // pred_fallthru
        _
      %p167 = scmp.lt.s32.totalorder %s16, 2
      // Predicated region
      $region21: #{tpu_custom_call.1} parent=5 // pred_check
        %p168 = pneg %p167
      $region22: #{tpu_custom_call.1} parent=5 // pred_check_branch
        %170 = sbr.rel (%p168) target = $region24
      $region23: #{tpu_custom_call.1} parent=5 // pred_region
        // Predicated region
        $region25: #{tpu_custom_call.1} parent=23 // pred_check
          %p171 = pneg %p50
        $region26: #{tpu_custom_call.1} parent=23 // pred_check_branch
          %173 = sbr.rel (%p171) target = $region28
        $region27: #{tpu_custom_call.1} parent=23 // pred_region
          %s174 = sand.u32 %s40, 1
          %s175 = scalar_lea.sflag [#allocation3], %s174
          %s176 = sand.u32 %s40, 1
          %s177 = smul.addr %s176, 32
          %s178 = scalar_lea.vmem [#allocation2], %s177
          %s179 = smul.u32 4, %s24
          %181 = vsyncadd %s175, 0
          %s182 = smul.addr %s23, 4
          %s183 = sadd.s32 %s179, %s182
          %s184 = smul.addr %s183, 8
          %s185 = scalar_lea.hbm %s0, %s184
          %s186 = sshll.u32 %s185, 4
          %s187 = int_to_ptr.hbm [resolvable:$true] %s186
          %s188 = sshll.u32 %s178, 4
          %s189 = int_to_ptr.vmem [resolvable:$true] %s188
          %194 = dma.hbm_to_vmem [thread:$0]  %s187, 512, %s189, %s175, 128, 128, 8
        $region28: #{tpu_custom_call.1} parent=23 // pred_fallthru
          _
      $region24: #{tpu_custom_call.1} parent=5 // pred_fallthru
        _
      %p195 = scmp.le.s32.totalorder 1, %s16
      %p196 = scmp.lt.s32.totalorder %s16, 3
      %p197 = pnand %p195, %p196
      %p198 = pneg %p197
      // Predicated region
      $region29: #{tpu_custom_call.1} parent=5 // pred_check
        _
      $region30: #{tpu_custom_call.1} parent=5 // pred_check_branch
        %200 = sbr.rel (%p197) target = $region32
      $region31: #{tpu_custom_call.1} parent=5 // pred_region
        %s201 = ssub.s32 %s16, 1
        %s202 = sand.u32 %s43, 1
        %s203 = scalar_lea.sflag [#allocation3], %s202
        %s204 = sand.u32 %s43, 1
        %s205 = smul.addr %s204, 32
        %s206 = scalar_lea.vmem [#allocation2], %s205
        // Predicated region
        $region33: #{tpu_custom_call.1} parent=31 // pred_check
          %p207 = pneg %p56
        $region34: #{tpu_custom_call.1} parent=31 // pred_check_branch
          %209 = sbr.rel (%p207) target = $region36
        $region35: #{tpu_custom_call.1} parent=31 // pred_region
          %211 = dma.done %s203, 512
        $region36: #{tpu_custom_call.1} parent=31 // pred_fallthru
          _
        // Predicated region
        $region37: #{tpu_custom_call.1} parent=31 // pred_check
          %p212 = pneg %p77
        $region38: #{tpu_custom_call.1} parent=31 // pred_check_branch
          %214 = sbr.rel (%p212) target = $region40
        $region39: #{tpu_custom_call.1} parent=31 // pred_region
          %216 = dma.done [#allocation6], 3072
        $region40: #{tpu_custom_call.1} parent=31 // pred_fallthru
          _
        // Predicated region
        $region41: #{tpu_custom_call.1} parent=31 // pred_check
          %p217 = pneg %p98
        $region42: #{tpu_custom_call.1} parent=31 // pred_check_branch
          %219 = sbr.rel (%p217) target = $region44
        $region43: #{tpu_custom_call.1} parent=31 // pred_region
          %221 = dma.done [#allocation6], 48
        $region44: #{tpu_custom_call.1} parent=31 // pred_fallthru
          _
        %s222 = sand.u32 %s43, 1
        %s223 = scalar_lea.sflag [#allocation3], %s222
        %s224 = sand.u32 %s43, 1
        %s225 = smul.addr %s224, 32
        %s226 = scalar_lea.vmem [#allocation2], %s225
        %p227 = pneg %p56
        %p228 = pneg %p53
        %p229 = pneg %p77
        %p230 = pneg %p74
        %p231 = pneg %p98
        %p232 = pneg %p95
        %p233 = pneg %p126
        %p234 = pneg %p123
        %s235 = sand.u32 %s113, 1
        %s236 = scalar_lea.sflag [#allocation4], %s235
        %s237 = sand.u32 %s113, 1
        %s238 = smul.addr %s237, 48
        %s239 = scalar_lea.vmem [#allocation8], %s238
        %s240 = smul.u32 4, %s26
        %s241 = smul.u32 4, %s26
        %v242 = vld [vmem:[%s206] sm:$0xff]
        %v243 = vld [vmem:[%s206 + $0x8] sm:$0xff]
        %v244 = vld [vmem:[%s206 + $0x10] sm:$0xff]
        %v245 = vld [vmem:[%s206 + $0x18] sm:$0xff]
        %v246 = vpack.c.bf16 %v243, %v242
        %v247 = vpack.c.bf16 %v245, %v244
        %v248 = vld [vmem:[#allocation5] sm:$0xff]
        %v249 = vld [vmem:[#allocation5 + $0x8] sm:$0xf]
        %v250 = vld [vmem:[#allocation5 + $0xc] sm:$0xff]
        %v251 = vld [vmem:[#allocation5 + $0x14] sm:$0xf]
        %v252 = vld [vmem:[#allocation5 + $0x18] sm:$0xff]
        %v253 = vld [vmem:[#allocation5 + $0x20] sm:$0xf]
        %v254 = vld [vmem:[#allocation5 + $0x24] sm:$0xff]
        %v255 = vld [vmem:[#allocation5 + $0x2c] sm:$0xf]
        %v256 = vld [vmem:[#allocation5 + $0x30] sm:$0xff]
        %v257 = vld [vmem:[#allocation5 + $0x38] sm:$0xf]
        %v258 = vld [vmem:[#allocation5 + $0x3c] sm:$0xff]
        %v259 = vld [vmem:[#allocation5 + $0x44] sm:$0xf]
        %v260 = vld [vmem:[#allocation5 + $0x48] sm:$0xff]
        %v261 = vld [vmem:[#allocation5 + $0x50] sm:$0xf]
        %v262 = vld [vmem:[#allocation5 + $0x54] sm:$0xff]
        %v263 = vld [vmem:[#allocation5 + $0x5c] sm:$0xf]
        %v264 = vld [vmem:[#allocation5 + $0x60] sm:$0xff]
        %v265 = vld [vmem:[#allocation5 + $0x68] sm:$0xf]
        %v266 = vld [vmem:[#allocation5 + $0x6c] sm:$0xff]
        %v267 = vld [vmem:[#allocation5 + $0x74] sm:$0xf]
        %v268 = vld [vmem:[#allocation5 + $0x78] sm:$0xff]
        %v269 = vld [vmem:[#allocation5 + $0x80] sm:$0xf]
        %v270 = vld [vmem:[#allocation5 + $0x84] sm:$0xff]
        %v271 = vld [vmem:[#allocation5 + $0x8c] sm:$0xf]
        %v272 = vld [vmem:[#allocation5 + $0x90] sm:$0xff]
        %v273 = vld [vmem:[#allocation5 + $0x98] sm:$0xf]
        %v274 = vld [vmem:[#allocation5 + $0x9c] sm:$0xff]
        %v275 = vld [vmem:[#allocation5 + $0xa4] sm:$0xf]
        %v276 = vld [vmem:[#allocation5 + $0xa8] sm:$0xff]
        %v277 = vld [vmem:[#allocation5 + $0xb0] sm:$0xf]
        %v278 = vld [vmem:[#allocation5 + $0xb4] sm:$0xff]
        %v279 = vld [vmem:[#allocation5 + $0xbc] sm:$0xf]
        %v280 = vld [vmem:[#allocation7] sm:$0x7]
        %v282 = vperm.slane %v280, 0
        %v283 = vperm.slane %v280, 1
        %v284 = vperm.slane %v280, 2
        %v320 = vunpack.c.l.b16 %v248
        %v321 = vunpack.c.h.b16 %v248
        %v322 = vunpack.c.l.b16 %v249
        %v323 = vunpack.c.l.b16 %v250
        %v324 = vunpack.c.h.b16 %v250
        %v325 = vunpack.c.l.b16 %v251
        %v326 = vunpack.c.l.b16 %v252
        %v327 = vunpack.c.h.b16 %v252
        %v328 = vunpack.c.l.b16 %v253
        %v329 = vunpack.c.l.b16 %v254
        %v330 = vunpack.c.h.b16 %v254
        %v331 = vunpack.c.l.b16 %v255
        %v332 = vunpack.c.l.b16 %v256
        %v333 = vunpack.c.h.b16 %v256
        %v334 = vunpack.c.l.b16 %v257
        %v335 = vunpack.c.l.b16 %v258
        %v336 = vunpack.c.h.b16 %v258
        %v337 = vunpack.c.l.b16 %v259
        %v338 = vunpack.c.l.b16 %v260
        %v339 = vunpack.c.h.b16 %v260
        %v340 = vunpack.c.l.b16 %v261
        %v341 = vunpack.c.l.b16 %v262
        %v342 = vunpack.c.h.b16 %v262
        %v343 = vunpack.c.l.b16 %v263
        %v344 = vunpack.c.l.b16 %v264
        %v345 = vunpack.c.h.b16 %v264
        %v346 = vunpack.c.l.b16 %v265
        %v347 = vunpack.c.l.b16 %v266
        %v348 = vunpack.c.h.b16 %v266
        %v349 = vunpack.c.l.b16 %v267
        %v350 = vunpack.c.l.b16 %v268
        %v351 = vunpack.c.h.b16 %v268
        %v352 = vunpack.c.l.b16 %v269
        %v353 = vunpack.c.l.b16 %v270
        %v354 = vunpack.c.h.b16 %v270
        %v355 = vunpack.c.l.b16 %v271
        %v356 = vunpack.c.l.b16 %v272
        %v357 = vunpack.c.h.b16 %v272
        %v358 = vunpack.c.l.b16 %v273
        %v359 = vunpack.c.l.b16 %v274
        %v360 = vunpack.c.h.b16 %v274
        %v361 = vunpack.c.l.b16 %v275
        %v362 = vunpack.c.l.b16 %v276
        %v363 = vunpack.c.h.b16 %v276
        %v364 = vunpack.c.l.b16 %v277
        %v365 = vunpack.c.l.b16 %v278
        %v366 = vunpack.c.h.b16 %v278
        %v367 = vunpack.c.l.b16 %v279
        %v368 = vpack.c.b16 %v323, %v320
        %v369 = vpack.c.b16 %v324, %v321
        %v370 = vpack.c.b16 %v325, %v322
        %v371 = vpack.c.b16 %v329, %v326
        %v372 = vpack.c.b16 %v330, %v327
        %v373 = vpack.c.b16 %v331, %v328
        %v374 = vpack.c.b16 %v335, %v332
        %v375 = vpack.c.b16 %v336, %v333
        %v376 = vpack.c.b16 %v337, %v334
        %v377 = vpack.c.b16 %v341, %v338
        %v378 = vpack.c.b16 %v342, %v339
        %v379 = vpack.c.b16 %v343, %v340
        %v380 = vpack.c.b16 %v347, %v344
        %v381 = vpack.c.b16 %v348, %v345
        %v382 = vpack.c.b16 %v349, %v346
        %v383 = vpack.c.b16 %v353, %v350
        %v384 = vpack.c.b16 %v354, %v351
        %v385 = vpack.c.b16 %v355, %v352
        %v386 = vpack.c.b16 %v359, %v356
        %v387 = vpack.c.b16 %v360, %v357
        %v388 = vpack.c.b16 %v361, %v358
        %v389 = vpack.c.b16 %v365, %v362
        %v390 = vpack.c.b16 %v366, %v363
        %v391 = vpack.c.b16 %v367, %v364
        %416 = vmatpush.bf16.msra.mxu0 %v389
        %417 = vmatpush.bf16.msra.mxu0 %v386
        %418 = vmatpush.bf16.msra.mxu0 %v383
        %419 = vmatpush.bf16.msra.mxu0 %v380
        %420 = vmatpush.bf16.msra.mxu0 %v377
        %421 = vmatpush.bf16.msra.mxu0 %v374
        %422 = vmatpush.bf16.msra.mxu0 %v371
        %423 = vmatpush.bf16.msra.mxu0 %v368
        %424 = vmatmul.bf16.gmra.mxu0 %v246
        %v425 = vpop.f32.mrf.mxu0
        %v426 = vadd.f32 %v282, %v425
        %v427 = vpop.f32.mrf.mxu0
        %v428 = vadd.f32 %v282, %v427
        %429 = vmatmul.bf16.gmra.mxu0 %v247
        %v430 = vpop.f32.mrf.mxu0
        %v431 = vadd.f32 %v282, %v430
        %v432 = vpop.f32.mrf.mxu0
        %v433 = vadd.f32 %v282, %v432
        %434 = vdwg.mxu0
        %435 = vmatpush.bf16.msra.mxu0 %v390
        %436 = vmatpush.bf16.msra.mxu0 %v387
        %437 = vmatpush.bf16.msra.mxu0 %v384
        %438 = vmatpush.bf16.msra.mxu0 %v381
        %439 = vmatpush.bf16.msra.mxu0 %v378
        %440 = vmatpush.bf16.msra.mxu0 %v375
        %441 = vmatpush.bf16.msra.mxu0 %v372
        %442 = vmatpush.bf16.msra.mxu0 %v369
        %443 = vmatmul.bf16.gmra.mxu0 %v246
        %v444 = vpop.f32.mrf.mxu0
        %v445 = vadd.f32 %v283, %v444
        %v446 = vpop.f32.mrf.mxu0
        %v447 = vadd.f32 %v283, %v446
        %448 = vmatmul.bf16.gmra.mxu0 %v247
        %v449 = vpop.f32.mrf.mxu0
        %v450 = vadd.f32 %v283, %v449
        %v451 = vpop.f32.mrf.mxu0
        %v452 = vadd.f32 %v283, %v451
        %453 = vdwg.mxu0
        %454 = vmatpush.bf16.msra.mxu0 %v391
        %455 = vmatpush.bf16.msra.mxu0 %v388
        %456 = vmatpush.bf16.msra.mxu0 %v385
        %457 = vmatpush.bf16.msra.mxu0 %v382
        %458 = vmatpush.bf16.msra.mxu0 %v379
        %459 = vmatpush.bf16.msra.mxu0 %v376
        %460 = vmatpush.bf16.msra.mxu0 %v373
        %461 = vmatpush.bf16.msra.mxu0 %v370
        %462 = vmatmul.bf16.gmra.mxu0 %v246
        %v463 = vpop.f32.mrf.mxu0
        %v464 = vadd.f32 %v284, %v463
        %v465 = vpop.f32.mrf.mxu0
        %v466 = vadd.f32 %v284, %v465
        %467 = vmatmul.bf16.gmra.mxu0 %v247
        %v468 = vpop.f32.mrf.mxu0
        %v469 = vadd.f32 %v284, %v468
        %v470 = vpop.f32.mrf.mxu0
        %v471 = vadd.f32 %v284, %v470
        %472 = vdwg.mxu0
        %v473 = vpack.c.bf16 %v445, %v426
        %v474 = vpack.c.bf16 %v464, %v464
        %v475 = vpack.c.bf16 %v447, %v428
        %v476 = vpack.c.bf16 %v466, %v466
        %v477 = vpack.c.bf16 %v450, %v431
        %v478 = vpack.c.bf16 %v469, %v469
        %v479 = vpack.c.bf16 %v452, %v433
        %v480 = vpack.c.bf16 %v471, %v471
        %481 = vst [vmem:[%s239] sm:$0xff] %v473
        %482 = vst [vmem:[%s239 + $0x8] sm:$0xf] %v474
        %483 = vst [vmem:[%s239 + $0xc] sm:$0xff] %v475
        %484 = vst [vmem:[%s239 + $0x14] sm:$0xf] %v476
        %485 = vst [vmem:[%s239 + $0x18] sm:$0xff] %v477
        %486 = vst [vmem:[%s239 + $0x20] sm:$0xf] %v478
        %487 = vst [vmem:[%s239 + $0x24] sm:$0xff] %v479
        %488 = vst [vmem:[%s239 + $0x2c] sm:$0xf] %v480
        %s489 = sand.u32 %s113, 1
        %s490 = scalar_lea.sflag [#allocation4], %s489
        %s491 = sand.u32 %s113, 1
        %s492 = smul.addr %s491, 48
        %s493 = scalar_lea.vmem [#allocation8], %s492
        // Predicated region
        $region45: #{tpu_custom_call.1} parent=31 // pred_check
          %p494 = pneg %p123
        $region46: #{tpu_custom_call.1} parent=31 // pred_check_branch
          %496 = sbr.rel (%p494) target = $region48
        $region47: #{tpu_custom_call.1} parent=31 // pred_region
          %s497 = smul.u32 4, %s26
          %499 = vsyncadd %s490, 0
          %s500 = smul.addr %s497, 3
          %s501 = smul.addr %s25, 12
          %s502 = sadd.s32 %s500, %s501
          %s503 = smul.addr %s502, 4
          %s504 = scalar_lea.hbm %s3, %s503
          %s505 = sshll.u32 %s493, 4
          %s506 = int_to_ptr.vmem [resolvable:$true] %s505
          %s507 = sshll.u32 %s504, 4
          %s508 = int_to_ptr.hbm [resolvable:$true] %s507
          %513 = dma.vmem_to_hbm [thread:$0]  %s506, 768, %s508, %s490, 192, 192, 12
        $region48: #{tpu_custom_call.1} parent=31 // pred_fallthru
          _
      $region32: #{tpu_custom_call.1} parent=5 // pred_fallthru
        _
      %p514 = scmp.le.s32.totalorder 2, %s16
      // Predicated region
      $region49: #{tpu_custom_call.1} parent=5 // pred_check
        %p515 = pneg %p514
      $region50: #{tpu_custom_call.1} parent=5 // pred_check_branch
        %517 = sbr.rel (%p515) target = $region52
      $region51: #{tpu_custom_call.1} parent=5 // pred_region
        %s518 = ssub.s32 %s16, 2
        // Predicated region
        $region53: #{tpu_custom_call.1} parent=51 // pred_check
          %p519 = pneg %p129
        $region54: #{tpu_custom_call.1} parent=51 // pred_check_branch
          %521 = sbr.rel (%p519) target = $region56
        $region55: #{tpu_custom_call.1} parent=51 // pred_region
          %s522 = sand.u32 %s114, 1
          %s523 = scalar_lea.sflag [#allocation4], %s522
          %s524 = sand.u32 %s114, 1
          %s525 = smul.addr %s524, 48
          %s526 = scalar_lea.vmem [#allocation8], %s525
          %528 = dma.done %s523, 768
        $region56: #{tpu_custom_call.1} parent=51 // pred_fallthru
          _
      $region52: #{tpu_custom_call.1} parent=5 // pred_fallthru
        _
    $region6: #{tpu_custom_call.1} parent=1 // loop_footer
      %s20 = sadd.s32 1, %s16
    $region7: #{tpu_custom_call.1} parent=1 // loop_footer_branch
      %15 = sbr.rel target = $region3
    $region8: #{tpu_custom_call.1} parent=1 // loop_exit
      _
    %529 = vsyncpa [#allocation3], 1
    %s530 = scalar_lea.sflag [#allocation3], 1
    %531 = vsyncpa %s530, 1
    %532 = vsyncpa [#allocation6], 1
    %533 = vsyncpa [#allocation4], 1
    %s534 = scalar_lea.sflag [#allocation4], 1
    %535 = vsyncpa %s534, 1

</llo_original>
